<compile_context>
chip_gen: v5e
topology: v5e:2x2
jax: 0.10.0
libtpu: 0.0.40
codegen_flags: <defaults>
</compile_context>

<pallas_src>
import jax
import jax.numpy as jnp
from jax.experimental import pallas as pl
from jax.experimental.pallas import tpu as pltpu


def _round_up(x: int, m: int) -> int:
    return (x + m - 1) // m * m


def _nodepiece_kernel(idx_ref, table_ref, out_ref):
    """idx_ref:   (blk, 2) int32 -- col 0: anchor/rel index for this output row,
                                    col 1: distance index for anchor rows, -1 otherwise.
       table_ref: (V, D) embedding table (resident, original dtype).
       out_ref:   (blk, D) output rows (already in final concat order)."""
    rows = idx_ref.shape[0]
    vocab = table_ref.shape[0]

    idx = idx_ref[...]                                               # (blk, 2)
    iota = jax.lax.broadcasted_iota(jnp.int32, (rows, vocab), 1)     # single iota, reused

    # Fused 2-hot built in f32 (exact; avoids emulated bf16 VALU work on v5e),
    # cast once to the table dtype right before the MXU dot.  Rows where both
    # indices match the same id correctly get a 2 -> 2 * table[id].
    two_hot = ((iota == idx[:, 0:1]).astype(jnp.float32)
               + (iota == idx[:, 1:2]).astype(jnp.float32))          # (blk, V)

    out_ref[...] = jnp.dot(two_hot.astype(table_ref.dtype), table_ref[...],
                           preferred_element_type=jnp.float32
                           ).astype(out_ref.dtype)                   # one dense store


def nodepiece_embedding(anchors, relational_context, distance, table,
                        *, block_rows: int = 512, out_dtype=None):
    """anchors/distance: (B, A) int, relational_context: (B, R) int, table: (V, D).

    out_dtype defaults to table.dtype (f32 table -> exact PyTorch parity).
    Pass out_dtype=jnp.bfloat16 (and/or a bf16 table) to halve HBM writeback.
    """
    B, A = anchors.shape
    _, R = relational_context.shape
    V, D = table.shape
    S = A + R
    N = B * S
    out_dtype = table.dtype if out_dtype is None else out_dtype

    # Row order matches concat([anc_emb, rel_emb], dim=1) after the reshape.
    idx_all = jnp.concatenate(
        [anchors.astype(jnp.int32), relational_context.astype(jnp.int32)],
        axis=1).reshape(N)                                           # (N,)
    dist_pad = jnp.concatenate(
        [distance.astype(jnp.int32), jnp.full((B, R), -1, jnp.int32)],
        axis=1).reshape(N)                                           # (N,), -1 => zero row
    idx2 = jnp.stack([idx_all, dist_pad], axis=1)                    # (N, 2) int32

    # Balanced, sublane-aligned row blocks:
    #  * target `block_rows` (512) -- mem-bound tiling sweet spot,
    #  * >=2 grid steps once N is non-trivial so "parallel" shards across both
    #    v7x TensorCores (one extra ~0.35us step is harmless on v5e/v6e),
    #  * balancing bounds sentinel-padding waste to <8 rows per block.
    min_blocks = 2 if N > 256 else 1
    n_blocks = max(pl.cdiv(N, block_rows), min_blocks)
    blk = _round_up(pl.cdiv(N, n_blocks), 8)
    n_pad = blk * n_blocks
    if n_pad != N:
        idx2 = jnp.pad(idx2, ((0, n_pad - N), (0, 0)), constant_values=-1)

    # VMEM budget (double-buffered idx + out, resident table, 2-hot + f32 acc
    # intermediates) with 2x margin; clamp inside v7x's 64 MiB physical VMEM.
    tbl_bytes = V * D * jnp.dtype(table.dtype).itemsize
    out_bytes = blk * D * jnp.dtype(out_dtype).itemsize
    est = (2 * blk * 2 * 4          # packed indices (double-buffered)
           + 2 * tbl_bytes          # table (worst case: not revisit-deduped)
           + 2 * out_bytes          # output tiles (double-buffered)
           + blk * V * 4            # 2-hot intermediate
           + blk * D * 4)           # f32 accumulator intermediate
    vmem_limit = min(max(16 * 1024 * 1024, 2 * est), 48 * 1024 * 1024)

    out_flat = pl.pallas_call(
        _nodepiece_kernel,
        out_shape=jax.ShapeDtypeStruct((n_pad, D), out_dtype),
        grid_spec=pltpu.PrefetchScalarGridSpec(
            num_scalar_prefetch=0,
            grid=(n_blocks,),
            in_specs=[
                pl.BlockSpec((blk, 2), lambda i: (i, 0)),            # packed indices
                pl.BlockSpec((V, D), lambda i: (0, 0)),              # table, constant map
            ],
            out_specs=pl.BlockSpec((blk, D), lambda i: (i, 0)),
        ),
        compiler_params=pltpu.CompilerParams(
            dimension_semantics=("parallel",),                       # shards rows on v7x
            vmem_limit_bytes=vmem_limit,
        ),
    )(idx2, table)

    return out_flat[:N].reshape(B, S, D)


if __name__ == "__main__":
    # Module hyperparams (small, consistent with BaseNodePieceEmbeddingTable)
    vocab_size = 64
    n_anchor = 4
    n_rel = 4
    sequence_length = n_anchor + n_rel
    embedding_dim = 128
    batch = 2

    key = jax.random.PRNGKey(0)
    k_w, k_a, k_r, k_d = jax.random.split(key, 4)

    # Deterministic xavier_uniform init of nn.Embedding(vocab_size, embedding_dim)
    bound = (6.0 / (vocab_size + embedding_dim)) ** 0.5
    emb_table = jax.random.uniform(k_w, (vocab_size, embedding_dim),
                                   jnp.float32, -bound, bound)

    x = {
        "anchors": jax.random.randint(k_a, (batch, n_anchor), 0, vocab_size, jnp.int32),
        "relational_context": jax.random.randint(k_r, (batch, n_rel), 0, vocab_size, jnp.int32),
        "distance": jax.random.randint(k_d, (batch, n_anchor), 0, vocab_size, jnp.int32),
    }

    out = nodepiece_embedding(x["anchors"], x["relational_context"],
                              x["distance"], emb_table)
    out = jax.block_until_ready(out)
    assert out.shape == (batch, sequence_length, embedding_dim)
    assert out.dtype == emb_table.dtype

    # Full-f32 reference of the PyTorch forward (f32 table end-to-end -> tight tol).
    ref_f32 = jnp.concatenate(
        [emb_table[x["anchors"]] + emb_table[x["distance"]],
         emb_table[x["relational_context"]]],
        axis=1)
    assert jnp.allclose(out, ref_f32, atol=1e-5, rtol=1e-5), "mismatch vs f32 reference"

    # Larger, non-block-aligned batch to exercise multi-step grid + tail padding.
    k_a2, k_r2, k_d2 = jax.random.split(k_w, 3)
    B2, A2, R2 = 77, 20, 12
    anc2 = jax.random.randint(k_a2, (B2, A2), 0, vocab_size, jnp.int32)
    rel2 = jax.random.randint(k_r2, (B2, R2), 0, vocab_size, jnp.int32)
    dst2 = jax.random.randint(k_d2, (B2, A2), 0, vocab_size, jnp.int32)
    out2 = jax.block_until_ready(nodepiece_embedding(anc2, rel2, dst2, emb_table))
    ref2 = jnp.concatenate([emb_table[anc2] + emb_table[dst2], emb_table[rel2]], axis=1)
    assert out2.shape == (B2, A2 + R2, embedding_dim)
    assert jnp.allclose(out2, ref2, atol=1e-5, rtol=1e-5), "mismatch on large batch"

    print("KERNEL_OK")
</pallas_src>

<mosaic_0001>
module attributes {stable_mosaic.version = 11 : i64} {
  func.func @_nodepiece_kernel(%arg0: i32, %arg1: memref<16x2xi32, #tpu.memory_space<vmem>>, %arg2: memref<64x128xf32, #tpu.memory_space<vmem>>, %arg3: memref<16x128xf32, #tpu.memory_space<vmem>>) attributes {dimension_semantics = [#tpu.dimension_semantics<parallel>], iteration_bounds = array<i64: 1>, scalar_prefetch = 0 : i64, scratch_operands = 0 : i64, tpu.core_type = #tpu.core_type<tc>, window_params = [{transform_indices = @transform_0, window_bounds = array<i64: 16, 2>}, {pipeline_mode = #tpu.pipeline_mode<synchronous>, transform_indices = @transform_1, window_bounds = array<i64: 64, 128>}, {transform_indices = @transform_2, window_bounds = array<i64: 16, 128>}]} {
    %c0 = arith.constant 0 : index
    %c0_0 = arith.constant 0 : index
    %0 = vector.load %arg1[%c0, %c0_0] : memref<16x2xi32, #tpu.memory_space<vmem>>, vector<16x2xi32>
    %1 = tpu.iota {dimensions = array<i32: 1>} : vector<16x64xi32>
    %2 = vector.extract_strided_slice %0 {offsets = [0, 0], sizes = [16, 1], strides = [1, 1]} : vector<16x2xi32> to vector<16x1xi32>
    %3 = vector.broadcast %2 : vector<16x1xi32> to vector<16x64xi32>
    %4 = arith.cmpi eq, %1, %3 : vector<16x64xi32>
    %5 = arith.extui %4 : vector<16x64xi1> to vector<16x64xi32>
    %6 = arith.sitofp %5 : vector<16x64xi32> to vector<16x64xf32>
    %7 = vector.extract_strided_slice %0 {offsets = [0, 1], sizes = [16, 1], strides = [1, 1]} : vector<16x2xi32> to vector<16x1xi32>
    %8 = vector.broadcast %7 : vector<16x1xi32> to vector<16x64xi32>
    %9 = arith.cmpi eq, %1, %8 : vector<16x64xi32>
    %10 = arith.extui %9 : vector<16x64xi1> to vector<16x64xi32>
    %11 = arith.sitofp %10 : vector<16x64xi32> to vector<16x64xf32>
    %12 = arith.addf %6, %11 : vector<16x64xf32>
    %c0_1 = arith.constant 0 : index
    %c0_2 = arith.constant 0 : index
    %13 = vector.load %arg2[%c0_1, %c0_2] : memref<64x128xf32, #tpu.memory_space<vmem>>, vector<64x128xf32>
    %cst = arith.constant dense<0.000000e+00> : vector<16x128xf32>
    %14 = tpu.matmul %12, %13, %cst {dimension_numbers = #tpu.dot_dimension_numbers<[1], [0], [0], [1], [0, 0, 1, 1], [], []>} : vector<16x64xf32>, vector<64x128xf32>, vector<16x128xf32> -> vector<16x128xf32>
    %c0_3 = arith.constant 0 : index
    %c0_4 = arith.constant 0 : index
    %15 = vector.load %arg3[%c0_3, %c0_4] : memref<16x128xf32, #tpu.memory_space<vmem>>, vector<16x128xf32>
    tpu.vector_store %arg3[%c0_3, %c0_4], %14 {strides = array<i32>} : memref<16x128xf32, #tpu.memory_space<vmem>>, vector<16x128xf32>,
    return
  }
  func.func @transform_0(%arg0: i32) -> (i32, i32) {
    %c0_i32 = arith.constant 0 : i32
    %c0_i32_0 = arith.constant 0 : i32
    return %arg0, %c0_i32 : i32, i32
  }
  func.func @transform_1(%arg0: i32) -> (i32, i32) {
    %c0_i32 = arith.constant 0 : i32
    %c0_i32_0 = arith.constant 0 : i32
    %c0_i32_1 = arith.constant 0 : i32
    return %c0_i32, %c0_i32_0 : i32, i32
  }
  func.func @transform_2(%arg0: i32) -> (i32, i32) {
    %c0_i32 = arith.constant 0 : i32
    %c0_i32_0 = arith.constant 0 : i32
    return %arg0, %c0_i32 : i32, i32
  }
}

</mosaic_0001>

<llo_original>
// kernel: tpu_custom_call.1
$region0: #{tpu_custom_call.1}
  #allocation0 [shape = 'u32[]', space=smem, size = 0x4, offset = 0x4, fixed_abs, tag = 'smem constant byte address 0x4 - core index']
  #allocation1 [shape = 'u32[72,128]{1,0:T(1,128)}', space=vmem, size = 0x9000, scoped, tag = 'internal scratch']
  %s0 = inlined_call_operand.vmem [shape: s32[16,2], index: 0, kind: input, shape index: {}]
  %s1 = inlined_call_operand.hbm [shape: f32[64,128], index: 1, kind: input, shape index: {}]
  %s2 = inlined_call_operand.hbm [shape: f32[16,128], index: 2, kind: output, shape index: {}]
  %s3 = sld [smem:[#allocation0]]
  $region22: #{tpu_custom_call.1} parent=0
    _
  %s5 = ssub.s32 1, %s3
  %s6 = scalar_select 0, %s5, %s3
  $region1: #{tpu_custom_call.1} parent=0
    #allocation2 [shape = 'u8[32768]{0}', space=vmem, size = 0x8000, scoped, tag = 'input window, operand 1, single buffered']
    #allocation3 [shape = 's32[1]{0}', space=sflag, size = 0x4, scoped, tag = 'scoped memory for tpu_custom_call.1']
    #allocation4 [shape = 's32[1]{0}', space=sflag, size = 0x4, scoped, tag = 'scoped memory for tpu_custom_call.1']
    #allocation5 [shape = 'u8[8192]{0}', space=vmem, size = 0x2000, scoped, tag = 'output window, operand 0, single buffered']
    %7 = vsyncpa [#allocation3], 0
    %8 = vsyncpa [#allocation4], 0
    // Predicated region
    $region2: #{tpu_custom_call.1} parent=1 // pred_check
      _
    $region3: #{tpu_custom_call.1} parent=1 // pred_check_branch
      %10 = sbr.rel (0) target = $region5
    $region4: #{tpu_custom_call.1} parent=1 // pred_region
      _
    $region5: #{tpu_custom_call.1} parent=1 // pred_fallthru
      _
    // Predicated region
    $region6: #{tpu_custom_call.1} parent=1 // pred_check
      _
    $region7: #{tpu_custom_call.1} parent=1 // pred_check_branch
      %12 = sbr.rel (0) target = $region9
    $region8: #{tpu_custom_call.1} parent=1 // pred_region
      %14 = vsyncadd [#allocation3], 0
      %s15 = sshll.u32 %s1, 4
      %s16 = int_to_ptr.hbm [resolvable:$true] %s15
      %s17 = sshll.u32 [#allocation2], 4
      %s18 = int_to_ptr.vmem [resolvable:$true] %s17
      %23 = dma.hbm_to_vmem [thread:$0]  %s16, 1024, %s18, [#allocation3], 128, 128, 8
    $region9: #{tpu_custom_call.1} parent=1 // pred_fallthru
      _
    // Predicated region
    $region10: #{tpu_custom_call.1} parent=1 // pred_check
      _
    $region11: #{tpu_custom_call.1} parent=1 // pred_check_branch
      %25 = sbr.rel (0) target = $region13
    $region12: #{tpu_custom_call.1} parent=1 // pred_region
      %27 = dma.done [#allocation3], 1024
    $region13: #{tpu_custom_call.1} parent=1 // pred_fallthru
      _
    %v28 = vld [vmem:[%s0] sm:$0xff]
    %v29 = vld [vmem:[%s0 + $0x8] sm:$0xff]
    %v30 = vlaneseq
    %v31 = vand.u32 %v30, 127
    %32 = vset.pattern.permute.xlu0 0
    %33 = vperm.xlu0 %32, %v28
    %v34 = vpop.permute.xlu0 %33
    %35 = vset.pattern.permute.xlu0 0
    %36 = vperm.xlu0 %35, %v29
    %v37 = vpop.permute.xlu0 %36
    %vm38 = vcmp.eq.s32.totalorder %v31, %v34
    %vm39 = vcmp.eq.s32.totalorder %v31, %v37
    %v40 = vsel %vm38, 1, 0
    %v41 = vsel %vm39, 1, 0
    %v42 = vcvt.s32.f32 %v40
    %v43 = vcvt.s32.f32 %v41
    %44 = vset.pattern.permute.xlu0 1
    %45 = vperm.xlu0 %44, %v28
    %v46 = vpop.permute.xlu0 %45
    %47 = vset.pattern.permute.xlu0 1
    %48 = vperm.xlu0 %47, %v29
    %v49 = vpop.permute.xlu0 %48
    %vm50 = vcmp.eq.s32.totalorder %v31, %v46
    %vm51 = vcmp.eq.s32.totalorder %v31, %v49
    %v52 = vsel %vm50, 1, 0
    %v53 = vsel %vm51, 1, 0
    %v54 = vcvt.s32.f32 %v52
    %v55 = vcvt.s32.f32 %v53
    %v56 = vadd.f32 %v42, %v54
    %v57 = vadd.f32 %v43, %v55
    %v58 = vld [vmem:[#allocation2] sm:$0xff]
    %v59 = vld [vmem:[#allocation2 + $0x8] sm:$0xff]
    %v60 = vld [vmem:[#allocation2 + $0x10] sm:$0xff]
    %v61 = vld [vmem:[#allocation2 + $0x18] sm:$0xff]
    %v62 = vld [vmem:[#allocation2 + $0x20] sm:$0xff]
    %v63 = vld [vmem:[#allocation2 + $0x28] sm:$0xff]
    %v64 = vld [vmem:[#allocation2 + $0x30] sm:$0xff]
    %v65 = vld [vmem:[#allocation2 + $0x38] sm:$0xff]
    %vm66 = vcmask 523264
    %v68 = vsel %vm66, %v56, 0
    %v71 = vsel %vm66, %v57, 0
    %73 = vmatpush.msra.mxu0 0.0
    %74 = vmatpush.msra.mxu0 0.0
    %75 = vmatpush.msra.mxu0 0.0
    %76 = vmatpush.msra.mxu0 0.0
    %77 = vmatpush.msra.mxu0 0.0
    %78 = vmatpush.msra.mxu0 0.0
    %79 = vmatpush.msra.mxu0 0.0
    %80 = vmatpush.msra.mxu0 0.0
    %81 = vmatpush.msra.mxu0 %v65
    %82 = vmatpush.msra.mxu0 %v64
    %83 = vmatpush.msra.mxu0 %v63
    %84 = vmatpush.msra.mxu0 %v62
    %85 = vmatpush.msra.mxu0 %v61
    %86 = vmatpush.msra.mxu0 %v60
    %87 = vmatpush.msra.mxu0 %v59
    %88 = vmatpush.msra.mxu0 %v58
    %89 = vmatmul.f32.gmra.mxu0 %v68
    %v90 = vpop.f32.mrf.mxu0
    %v91 = vadd.f32 0.0, %v90
    %92 = vmatmul.f32.gmra.mxu0 %v71
    %v93 = vpop.f32.mrf.mxu0
    %v94 = vadd.f32 0.0, %v93
    %95 = vdwg.mxu0
    %96 = vst [vmem:[#allocation5] sm:$0xff] %v91
    %97 = vst [vmem:[#allocation5 + $0x8] sm:$0xff] %v94
    // Predicated region
    $region14: #{tpu_custom_call.1} parent=1 // pred_check
      _
    $region15: #{tpu_custom_call.1} parent=1 // pred_check_branch
      %99 = sbr.rel (0) target = $region17
    $region16: #{tpu_custom_call.1} parent=1 // pred_region
      %101 = vsyncadd [#allocation4], 0
      %s102 = sshll.u32 [#allocation5], 4
      %s103 = int_to_ptr.vmem [resolvable:$true] %s102
      %s104 = sshll.u32 %s2, 4
      %s105 = int_to_ptr.hbm [resolvable:$true] %s104
      %110 = dma.vmem_to_hbm [thread:$0]  %s103, 256, %s105, [#allocation4], 128, 128, 8
    $region17: #{tpu_custom_call.1} parent=1 // pred_fallthru
      _
    // Predicated region
    $region18: #{tpu_custom_call.1} parent=1 // pred_check
      _
    $region19: #{tpu_custom_call.1} parent=1 // pred_check_branch
      %112 = sbr.rel (0) target = $region21
    $region20: #{tpu_custom_call.1} parent=1 // pred_region
      %114 = dma.done [#allocation4], 256
    $region21: #{tpu_custom_call.1} parent=1 // pred_fallthru
      _
    %115 = vsyncpa [#allocation3], 1
    %116 = vsyncpa [#allocation4], 1

</llo_original>
